<compile_context>
chip_gen: v7x
topology: tpu7x:2x2x1
jax: 0.10.0
libtpu: 0.0.40
codegen_flags: <defaults>
</compile_context>

<pallas_src>
import functools

import numpy as np

import jax
import jax.numpy as jnp
from jax.experimental import pallas as pl
from jax.experimental.pallas import tpu as pltpu


def _dygcn_kernel(x_ref, ae_ref, st_ref, wp_ref, exp_ref, red_ref, out_ref,
                  xg_scr, *, cheby_k: int):
    """Per-batch-block DyGCN forward.

    x_ref  : (bb, N, I)              -- node features
    ae_ref : (bb, N, Ea)             -- all_emb (builds the adaptive support)
    st_ref : (bb*N, E)               -- station_emb, row-flattened
    wp_ref : (E, K*I*O + O)          -- [weights_pool | bias_pool], lane-dense
    exp_ref: (K*I + 1, K*I*O + O)    -- constant expand selector
    red_ref: (K*I*O + O, O)          -- constant reduce selector
    out_ref: (bb*N, O)               -- row-flattened output
    xg_scr : (bb*N, K*I + 1) VMEM    -- flattener scratch for projected feats
    """
    bb, N, _ = x_ref.shape
    K = cheby_k

    x = x_ref[...].astype(jnp.float32)            # (bb, N, I)
    ae = ae_ref[...].astype(jnp.float32)          # (bb, N, Ea)

    # ---- adaptive supports: softmax(relu(ae @ ae^T), axis=-1), batched ----
    scores = jnp.einsum('bnd,bmd->bnm', ae, ae,
                        preferred_element_type=jnp.float32)        # (bb, N, N)
    scores = jnp.maximum(scores, 0.0)
    scores = scores - jnp.max(scores, axis=-1, keepdims=True)
    es = jnp.exp(scores)
    row_sum = jnp.sum(es, axis=-1, keepdims=True)
    inv = pl.reciprocal(row_sum, approx=True)     # EUP slot
    inv = inv * (2.0 - row_sum * inv)             # Newton step -> ~f32 acc.
    supports = es * inv                           # (bb, N, N)

    # ---- Chebyshev recursion on projected features (no T_k matrices) ----
    #   xg_0 = x, xg_1 = S @ x, xg_k = 2*(S @ xg_{k-1}) - xg_{k-2}
    xg_list = [x]
    if K > 1:
        xg_list.append(jnp.einsum('bnm,bmi->bni', supports, x,
                                  preferred_element_type=jnp.float32))
    for _ in range(2, K):
        xg_list.append(
            2.0 * jnp.einsum('bnm,bmi->bni', supports, xg_list[-1],
                             preferred_element_type=jnp.float32)
            - xg_list[-2])

    # ---- flatten (bb, N, K*I + 1) -> (bb*N, K*I + 1) via VMEM scratch ----
    # (store per-batch row slabs; layout-safe, avoids in-kernel tiled reshape)
    ones_col = jnp.ones((N, 1), jnp.float32)
    for b in range(bb):
        xg_b = jnp.concatenate([xgk[b] for xgk in xg_list] + [ones_col],
                               axis=1)                             # (N, K*I+1)
        xg_scr[b * N:(b + 1) * N, :] = xg_b
    xg_flat = xg_scr[...]                                          # (bb*N, K*I+1)

    # ---- fused dynamic-weight (+bias) and per-node contraction, block-wide --
    #   w_all[r, (k*I+i)*O + o] = sum_e st[r,e] * weights_pool[e,k,i,o]
    #   w_all[r, K*I*O + o]     = sum_e st[r,e] * bias_pool[e,o]
    st = st_ref[...].astype(jnp.float32)                           # (bb*N, E)
    wp = wp_ref[...]                                               # (E, KIO+O)
    w_all = jnp.dot(st, wp, preferred_element_type=jnp.float32)

    #   out[r,o] = sum_j xg_flat[r,j] * w_all[r, j*O + o]
    #     expand: xg_exp[r, j*O+o] = xg_flat[r, j]
    #     reduce: sum over the strided lane groups -> (bb*N, O)
    xg_exp = jnp.dot(xg_flat, exp_ref[...],
                     preferred_element_type=jnp.float32)           # (bb*N, KIO+O)
    out = jnp.dot(xg_exp * w_all, red_ref[...],
                  preferred_element_type=jnp.float32)              # (bb*N, O)

    out_ref[...] = out.astype(out_ref.dtype)


def dygcn_pallas(x, all_emb, station_emb, weights_pool, bias_pool,
                 cheby_k, aggregate_type='sum', weights_cheby=None,
                 block_b=None):
    """Pallas DyGCN forward. Returns (B, N, dim_out) float32."""
    B, N, dim_in = x.shape
    E, K, I, O = weights_pool.shape
    assert K == cheby_k and I == dim_in
    assert station_emb.shape == (B, N, E)
    Ea = all_emb.shape[2]

    wp = weights_pool.astype(jnp.float32)
    if aggregate_type == 'weighted_sum':
        # Scaling each Chebyshev order's weights == scaling that order's
        # output before summation (bias is added afterwards, unscaled).
        wp = wp * weights_cheby[None, :, None, None].astype(jnp.float32)

    KI = K * I
    KIO = KI * O
    # (E, K, I, O) -> (E, K*I*O), then append bias_pool columns: (E, K*I*O+O).
    wp_cat = jnp.concatenate([wp.reshape(E, KIO),
                              bias_pool.astype(jnp.float32)], axis=1)

    # Constant selector matrices (host-side; no in-kernel int div/mod).
    #   expand[j, m] = 1 iff m // O == j   (j in [0, K*I], m in [0, K*I*O+O))
    #   reduce[m, o] = 1 iff m %  O == o
    m_idx = np.arange(KIO + O)
    expand_mat = jnp.asarray(
        (m_idx[None, :] // O == np.arange(KI + 1)[:, None]).astype(np.float32))
    reduce_mat = jnp.asarray(
        (m_idx[:, None] % O == np.arange(O)[None, :]).astype(np.float32))

    if block_b is None:
        block_b = 1
        for cand in (8, 4, 2):
            if B % cand == 0 and (cand * N) % 8 == 0:
                block_b = cand
                break
        if block_b < B and (block_b * N) % 8 != 0:
            block_b = B           # full-array block: always layout-legal
    assert B % block_b == 0, "block_b must divide batch size"
    assert block_b == B or (block_b * N) % 8 == 0, \
        "block_b*N must be a multiple of 8 (sublane tile) or cover the batch"

    # Row-flatten the per-node-only operands in the wrapper (free XLA reshape).
    st_flat = station_emb.reshape(B * N, E)

    kernel = functools.partial(_dygcn_kernel, cheby_k=cheby_k)

    out_flat = pl.pallas_call(
        kernel,
        out_shape=jax.ShapeDtypeStruct((B * N, O), jnp.float32),
        grid_spec=pltpu.PrefetchScalarGridSpec(
            num_scalar_prefetch=0,
            grid=(B // block_b,),
            in_specs=[
                pl.BlockSpec((block_b, N, dim_in), lambda g: (g, 0, 0)),
                pl.BlockSpec((block_b, N, Ea), lambda g: (g, 0, 0)),
                pl.BlockSpec((block_b * N, E), lambda g: (g, 0)),
                # Grid-invariant operands (constant index_map -> fetched once).
                pl.BlockSpec((E, KIO + O), lambda g: (0, 0)),
                pl.BlockSpec((KI + 1, KIO + O), lambda g: (0, 0)),
                pl.BlockSpec((KIO + O, O), lambda g: (0, 0)),
            ],
            out_specs=pl.BlockSpec((block_b * N, O), lambda g: (g, 0)),
            scratch_shapes=[pltpu.VMEM((block_b * N, KI + 1), jnp.float32)],
        ),
        compiler_params=pltpu.CompilerParams(
            dimension_semantics=("parallel",)),
    )(x, all_emb, st_flat, wp_cat, expand_mat, reduce_mat)

    return out_flat.reshape(B, N, O)


def dygcn_ref(x, all_emb, station_emb, weights_pool, bias_pool, cheby_k,
              aggregate_type='sum', weights_cheby=None):
    """Pure-JAX reference mirroring the PyTorch module (cheby_k >= 2)."""
    B, N, _ = all_emb.shape
    supports = jax.nn.softmax(
        jnp.maximum(jnp.matmul(all_emb, jnp.swapaxes(all_emb, 1, 2)), 0.0),
        axis=-1)
    t0 = jnp.broadcast_to(jnp.eye(N, dtype=x.dtype), (B, N, N))
    support_set = [t0, supports]
    for _ in range(2, cheby_k):
        support_set.append(
            jnp.matmul(2.0 * supports, support_set[-1]) - support_set[-2])
    supports_cheby = jnp.stack(support_set, axis=0).transpose(1, 0, 2, 3)
    weights = jnp.einsum('bni,ikop->bnkop', station_emb, weights_pool)
    bias = jnp.matmul(station_emb, bias_pool)
    x_g = jnp.einsum('bkij,bjd->bkid', supports_cheby, x)
    x_g_conv = jnp.einsum('bkni,bnkio->bnko', x_g, weights)
    if aggregate_type == 'weighted_sum':
        x_g_conv = x_g_conv * weights_cheby[None, None, :, None]
    return x_g_conv.sum(axis=2) + bias


if __name__ == "__main__":
    # Small, module-consistent shapes.
    B, N = 2, 16
    dim_in, dim_out = 4, 8
    cheby_k = 3
    embed_dim = 8

    key = jax.random.PRNGKey(0)
    k_x, k_ae, k_st, k_wp, k_bp = jax.random.split(key, 5)

    x = jax.random.normal(k_x, (B, N, dim_in), dtype=jnp.float32)
    all_emb = jax.random.normal(k_ae, (B, N, embed_dim), dtype=jnp.float32)
    station_emb = jax.random.normal(k_st, (B, N, embed_dim), dtype=jnp.float32)

    # Deterministic parameter init (synthetic; no checkpoint load).
    weights_pool = 0.1 * jax.random.normal(
        k_wp, (embed_dim, cheby_k, dim_in, dim_out), dtype=jnp.float32)
    bias_pool = 0.1 * jax.random.normal(
        k_bp, (embed_dim, dim_out), dtype=jnp.float32)
    weights_cheby = jnp.array([1.0, 0.5, 0.25], dtype=jnp.float32)

    # --- 'sum' aggregation ---
    out = dygcn_pallas(x, all_emb, station_emb, weights_pool, bias_pool,
                       cheby_k, aggregate_type='sum')
    out = jax.block_until_ready(out)
    ref = jax.block_until_ready(
        dygcn_ref(x, all_emb, station_emb, weights_pool, bias_pool,
                  cheby_k, aggregate_type='sum'))
    assert out.shape == (B, N, dim_out)
    err_sum = float(jnp.max(jnp.abs(out - ref)))
    assert err_sum < 5e-4, f"'sum' mismatch vs reference: {err_sum}"

    # --- 'weighted_sum' aggregation (weights folded into the pool) ---
    out_w = dygcn_pallas(x, all_emb, station_emb, weights_pool, bias_pool,
                         cheby_k, aggregate_type='weighted_sum',
                         weights_cheby=weights_cheby)
    out_w = jax.block_until_ready(out_w)
    ref_w = jax.block_until_ready(
        dygcn_ref(x, all_emb, station_emb, weights_pool, bias_pool,
                  cheby_k, aggregate_type='weighted_sum',
                  weights_cheby=weights_cheby))
    err_w = float(jnp.max(jnp.abs(out_w - ref_w)))
    assert err_w < 5e-4, f"'weighted_sum' mismatch vs reference: {err_w}"

    print("KERNEL_OK")
</pallas_src>

<mosaic_0001>
module attributes {stable_mosaic.version = 11 : i64} {
  func.func @_dygcn_kernel(%arg0: i32, %arg1: memref<2x16x4xf32, #tpu.memory_space<vmem>>, %arg2: memref<2x16x8xf32, #tpu.memory_space<vmem>>, %arg3: memref<32x8xf32, #tpu.memory_space<vmem>>, %arg4: memref<8x104xf32, #tpu.memory_space<vmem>>, %arg5: memref<13x104xf32, #tpu.memory_space<vmem>>, %arg6: memref<104x8xf32, #tpu.memory_space<vmem>>, %arg7: memref<32x8xf32, #tpu.memory_space<vmem>>, %arg8: memref<32x13xf32, #tpu.memory_space<vmem>>) attributes {dimension_semantics = [#tpu.dimension_semantics<parallel>], iteration_bounds = array<i64: 1>, scalar_prefetch = 0 : i64, scratch_operands = 1 : i64, tpu.core_type = #tpu.core_type<tc>, window_params = [{transform_indices = @transform_0, window_bounds = array<i64: 2, 16, 4>}, {transform_indices = @transform_1, window_bounds = array<i64: 2, 16, 8>}, {transform_indices = @transform_2, window_bounds = array<i64: 32, 8>}, {pipeline_mode = #tpu.pipeline_mode<synchronous>, transform_indices = @transform_3, window_bounds = array<i64: 8, 104>}, {pipeline_mode = #tpu.pipeline_mode<synchronous>, transform_indices = @transform_4, window_bounds = array<i64: 13, 104>}, {pipeline_mode = #tpu.pipeline_mode<synchronous>, transform_indices = @transform_5, window_bounds = array<i64: 104, 8>}, {transform_indices = @transform_6, window_bounds = array<i64: 32, 8>}]} {
    %c0 = arith.constant 0 : index
    %c0_0 = arith.constant 0 : index
    %c0_1 = arith.constant 0 : index
    %0 = vector.load %arg1[%c0, %c0_0, %c0_1] : memref<2x16x4xf32, #tpu.memory_space<vmem>>, vector<2x16x4xf32>
    %c0_2 = arith.constant 0 : index
    %c0_3 = arith.constant 0 : index
    %c0_4 = arith.constant 0 : index
    %1 = vector.load %arg2[%c0_2, %c0_3, %c0_4] : memref<2x16x8xf32, #tpu.memory_space<vmem>>, vector<2x16x8xf32>
    "tpu.trace_start"() <{level = 10 : i32, message = "bnd,bmd->bnm"}> : () -> ()
    %cst = arith.constant dense<0.000000e+00> : vector<2x16x16xf32>
    %2 = tpu.matmul %1, %1, %cst {dimension_numbers = #tpu.dot_dimension_numbers<[2], [2], [1], [1], [0, 0, 0, 1, 1, 1], [0], [0]>} : vector<2x16x8xf32>, vector<2x16x8xf32>, vector<2x16x16xf32> -> vector<2x16x16xf32>
    "tpu.trace_stop"() : () -> ()
    %cst_5 = arith.constant 0.000000e+00 : f32
    %3 = vector.broadcast %cst_5 : f32 to vector<2x16x16xf32>
    %4 = arith.maximumf %2, %3 : vector<2x16x16xf32>
    %cst_6 = arith.constant dense<0xFF800000> : vector<2x16xf32>
    %5 = vector.multi_reduction <maximumf>, %4, %cst_6 [2] : vector<2x16x16xf32> to vector<2x16xf32>
    %6 = vector.shape_cast %5 : vector<2x16xf32> to vector<2x16x1xf32>
    %7 = vector.broadcast %6 : vector<2x16x1xf32> to vector<2x16x16xf32>
    %8 = arith.subf %4, %7 : vector<2x16x16xf32>
    %9 = math.exp %8 : vector<2x16x16xf32>
    %cst_7 = arith.constant dense<0.000000e+00> : vector<2x16xf32>
    %10 = vector.multi_reduction <add>, %9, %cst_7 [2] : vector<2x16x16xf32> to vector<2x16xf32>
    %11 = vector.shape_cast %10 : vector<2x16xf32> to vector<2x16x1xf32>
    %12 = tpu.reciprocal %11 {approx = true} : vector<2x16x1xf32> -> vector<2x16x1xf32>
    %13 = arith.mulf %11, %12 : vector<2x16x1xf32>
    %cst_8 = arith.constant 2.000000e+00 : f32
    %14 = vector.broadcast %cst_8 : f32 to vector<2x16x1xf32>
    %15 = arith.subf %14, %13 : vector<2x16x1xf32>
    %16 = arith.mulf %12, %15 : vector<2x16x1xf32>
    %17 = vector.broadcast %16 : vector<2x16x1xf32> to vector<2x16x16xf32>
    %18 = arith.mulf %9, %17 : vector<2x16x16xf32>
    "tpu.trace_start"() <{level = 10 : i32, message = "bnm,bmi->bni"}> : () -> ()
    %cst_9 = arith.constant dense<0.000000e+00> : vector<2x16x4xf32>
    %19 = tpu.matmul %18, %0, %cst_9 {dimension_numbers = #tpu.dot_dimension_numbers<[2], [1], [1], [2], [0, 0, 0, 1, 1, 2], [0], [0]>} : vector<2x16x16xf32>, vector<2x16x4xf32>, vector<2x16x4xf32> -> vector<2x16x4xf32>
    %cst_10 = arith.constant dense<0.000000e+00> : vector<2x16x4xf32>
    %20 = tpu.matmul %18, %19, %cst_10 {dimension_numbers = #tpu.dot_dimension_numbers<[2], [1], [1], [2], [0, 0, 0, 1, 1, 2], [0], [0]>} : vector<2x16x16xf32>, vector<2x16x4xf32>, vector<2x16x4xf32> -> vector<2x16x4xf32>
    "tpu.trace_stop"() : () -> ()
    %cst_11 = arith.constant 2.000000e+00 : f32
    %21 = vector.broadcast %cst_11 : f32 to vector<2x16x4xf32>
    %22 = arith.mulf %21, %20 : vector<2x16x4xf32>
    %23 = arith.subf %22, %0 : vector<2x16x4xf32>
    %cst_12 = arith.constant 1.000000e+00 : f32
    %24 = vector.broadcast %cst_12 : f32 to vector<16x1xf32>
    %25 = vector.extract_strided_slice %0 {offsets = [0, 0, 0], sizes = [1, 16, 4], strides = [1, 1, 1]} : vector<2x16x4xf32> to vector<1x16x4xf32>
    %26 = vector.shape_cast %25 : vector<1x16x4xf32> to vector<16x4xf32>
    %27 = vector.extract_strided_slice %19 {offsets = [0, 0, 0], sizes = [1, 16, 4], strides = [1, 1, 1]} : vector<2x16x4xf32> to vector<1x16x4xf32>
    %28 = vector.shape_cast %27 : vector<1x16x4xf32> to vector<16x4xf32>
    %29 = vector.extract_strided_slice %23 {offsets = [0, 0, 0], sizes = [1, 16, 4], strides = [1, 1, 1]} : vector<2x16x4xf32> to vector<1x16x4xf32>
    %30 = vector.shape_cast %29 : vector<1x16x4xf32> to vector<16x4xf32>
    %31 = tpu.concatenate %26, %28, %30, %24 in 1 : vector<16x4xf32>, vector<16x4xf32>, vector<16x4xf32>, vector<16x1xf32> -> vector<16x13xf32>
    %c0_13 = arith.constant 0 : index
    %c0_14 = arith.constant 0 : index
    %32 = vector.load %arg8[%c0_13, %c0_14] : memref<32x13xf32, #tpu.memory_space<vmem>>, vector<16x13xf32>
    tpu.vector_store %arg8[%c0_13, %c0_14], %31 {strides = array<i32>} : memref<32x13xf32, #tpu.memory_space<vmem>>, vector<16x13xf32>,
    %33 = vector.extract_strided_slice %0 {offsets = [1, 0, 0], sizes = [1, 16, 4], strides = [1, 1, 1]} : vector<2x16x4xf32> to vector<1x16x4xf32>
    %34 = vector.shape_cast %33 : vector<1x16x4xf32> to vector<16x4xf32>
    %35 = vector.extract_strided_slice %19 {offsets = [1, 0, 0], sizes = [1, 16, 4], strides = [1, 1, 1]} : vector<2x16x4xf32> to vector<1x16x4xf32>
    %36 = vector.shape_cast %35 : vector<1x16x4xf32> to vector<16x4xf32>
    %37 = vector.extract_strided_slice %23 {offsets = [1, 0, 0], sizes = [1, 16, 4], strides = [1, 1, 1]} : vector<2x16x4xf32> to vector<1x16x4xf32>
    %38 = vector.shape_cast %37 : vector<1x16x4xf32> to vector<16x4xf32>
    %39 = tpu.concatenate %34, %36, %38, %24 in 1 : vector<16x4xf32>, vector<16x4xf32>, vector<16x4xf32>, vector<16x1xf32> -> vector<16x13xf32>
    %c16 = arith.constant 16 : index
    %c0_15 = arith.constant 0 : index
    %40 = vector.load %arg8[%c16, %c0_15] : memref<32x13xf32, #tpu.memory_space<vmem>>, vector<16x13xf32>
    tpu.vector_store %arg8[%c16, %c0_15], %39 {strides = array<i32>} : memref<32x13xf32, #tpu.memory_space<vmem>>, vector<16x13xf32>,
    %c0_16 = arith.constant 0 : index
    %c0_17 = arith.constant 0 : index
    %41 = vector.load %arg8[%c0_16, %c0_17] : memref<32x13xf32, #tpu.memory_space<vmem>>, vector<32x13xf32>
    %c0_18 = arith.constant 0 : index
    %c0_19 = arith.constant 0 : index
    %42 = vector.load %arg3[%c0_18, %c0_19] : memref<32x8xf32, #tpu.memory_space<vmem>>, vector<32x8xf32>
    %c0_20 = arith.constant 0 : index
    %c0_21 = arith.constant 0 : index
    %43 = vector.load %arg4[%c0_20, %c0_21] : memref<8x104xf32, #tpu.memory_space<vmem>>, vector<8x104xf32>
    %cst_22 = arith.constant dense<0.000000e+00> : vector<32x104xf32>
    %44 = tpu.matmul %42, %43, %cst_22 {dimension_numbers = #tpu.dot_dimension_numbers<[1], [0], [0], [1], [0, 0, 1, 1], [], []>} : vector<32x8xf32>, vector<8x104xf32>, vector<32x104xf32> -> vector<32x104xf32>
    %c0_23 = arith.constant 0 : index
    %c0_24 = arith.constant 0 : index
    %45 = vector.load %arg5[%c0_23, %c0_24] : memref<13x104xf32, #tpu.memory_space<vmem>>, vector<13x104xf32>
    %cst_25 = arith.constant dense<0.000000e+00> : vector<32x104xf32>
    %46 = tpu.matmul %41, %45, %cst_25 {dimension_numbers = #tpu.dot_dimension_numbers<[1], [0], [0], [1], [0, 0, 1, 1], [], []>} : vector<32x13xf32>, vector<13x104xf32>, vector<32x104xf32> -> vector<32x104xf32>
    %47 = arith.mulf %46, %44 : vector<32x104xf32>
    %c0_26 = arith.constant 0 : index
    %c0_27 = arith.constant 0 : index
    %48 = vector.load %arg6[%c0_26, %c0_27] : memref<104x8xf32, #tpu.memory_space<vmem>>, vector<104x8xf32>
    %cst_28 = arith.constant dense<0.000000e+00> : vector<32x8xf32>
    %49 = tpu.matmul %47, %48, %cst_28 {dimension_numbers = #tpu.dot_dimension_numbers<[1], [0], [0], [1], [0, 0, 1, 1], [], []>} : vector<32x104xf32>, vector<104x8xf32>, vector<32x8xf32> -> vector<32x8xf32>
    %c0_29 = arith.constant 0 : index
    %c0_30 = arith.constant 0 : index
    %50 = vector.load %arg7[%c0_29, %c0_30] : memref<32x8xf32, #tpu.memory_space<vmem>>, vector<32x8xf32>
    tpu.vector_store %arg7[%c0_29, %c0_30], %49 {strides = array<i32>} : memref<32x8xf32, #tpu.memory_space<vmem>>, vector<32x8xf32>,
    return
  }
  func.func @transform_0(%arg0: i32) -> (i32, i32, i32) {
    %c0_i32 = arith.constant 0 : i32
    %c0_i32_0 = arith.constant 0 : i32
    %c0_i32_1 = arith.constant 0 : i32
    return %arg0, %c0_i32, %c0_i32_0 : i32, i32, i32
  }
  func.func @transform_1(%arg0: i32) -> (i32, i32, i32) {
    %c0_i32 = arith.constant 0 : i32
    %c0_i32_0 = arith.constant 0 : i32
    %c0_i32_1 = arith.constant 0 : i32
    return %arg0, %c0_i32, %c0_i32_0 : i32, i32, i32
  }
  func.func @transform_2(%arg0: i32) -> (i32, i32) {
    %c0_i32 = arith.constant 0 : i32
    %c0_i32_0 = arith.constant 0 : i32
    return %arg0, %c0_i32 : i32, i32
  }
  func.func @transform_3(%arg0: i32) -> (i32, i32) {
    %c0_i32 = arith.constant 0 : i32
    %c0_i32_0 = arith.constant 0 : i32
    %c0_i32_1 = arith.constant 0 : i32
    return %c0_i32, %c0_i32_0 : i32, i32
  }
  func.func @transform_4(%arg0: i32) -> (i32, i32) {
    %c0_i32 = arith.constant 0 : i32
    %c0_i32_0 = arith.constant 0 : i32
    %c0_i32_1 = arith.constant 0 : i32
    return %c0_i32, %c0_i32_0 : i32, i32
  }
  func.func @transform_5(%arg0: i32) -> (i32, i32) {
    %c0_i32 = arith.constant 0 : i32
    %c0_i32_0 = arith.constant 0 : i32
    %c0_i32_1 = arith.constant 0 : i32
    return %c0_i32, %c0_i32_0 : i32, i32
  }
  func.func @transform_6(%arg0: i32) -> (i32, i32) {
    %c0_i32 = arith.constant 0 : i32
    %c0_i32_0 = arith.constant 0 : i32
    return %arg0, %c0_i32 : i32, i32
  }
}

</mosaic_0001>

<llo_original>
// kernel: tpu_custom_call.1
$region0: #{tpu_custom_call.1}
  #allocation0 [shape = 'u32[]', space=smem, size = 0x4, offset = 0x4, fixed_abs, tag = 'smem constant byte address 0x4 - core index']
  #allocation1 [shape = 'u32[144,128]{1,0:T(1,128)}', space=vmem, size = 0x12000, scoped, tag = 'internal scratch']
  #allocation2 [shape = 'f32[32,13]{1,0:T(8,128)}', space=vmem, size = 0x4000, scoped, tag = 'scratch operand']
  %s0 = inlined_call_operand.vmem [shape: f32[2,16,4], index: 0, kind: input, shape index: {}]
  %s1 = inlined_call_operand.vmem [shape: f32[2,16,8], index: 1, kind: input, shape index: {}]
  %s2 = inlined_call_operand.vmem [shape: f32[32,8], index: 2, kind: input, shape index: {}]
  %s3 = inlined_call_operand.vmem [shape: f32[8,104], index: 3, kind: input, shape index: {}]
  %s4 = inlined_call_operand.vmem [shape: f32[13,104], index: 4, kind: input, shape index: {}]
  %s5 = inlined_call_operand.vmem [shape: f32[104,8], index: 5, kind: input, shape index: {}]
  %s6 = inlined_call_operand.vmem [shape: f32[32,8], index: 6, kind: output, shape index: {}]
  %s7 = sld [smem:[#allocation0]]
  $region34: #{tpu_custom_call.1} parent=0
    _
  %s9 = ssub.s32 1, %s7
  %s10 = scalar_select 0, %s9, %s7
  // Predicated region
  $region2: #{tpu_custom_call.1} parent=0 // pred_check
    _
  $region3: #{tpu_custom_call.1} parent=0 // pred_check_branch
    %12 = sbr.rel (0) target = $region5
  $region4: #{tpu_custom_call.1} parent=0 // pred_region
    _
  $region5: #{tpu_custom_call.1} parent=0 // pred_fallthru
    _
  // Predicated region
  $region6: #{tpu_custom_call.1} parent=0 // pred_check
    _
  $region7: #{tpu_custom_call.1} parent=0 // pred_check_branch
    %14 = sbr.rel (0) target = $region9
  $region8: #{tpu_custom_call.1} parent=0 // pred_region
    _
  $region9: #{tpu_custom_call.1} parent=0 // pred_fallthru
    _
  // Predicated region
  $region10: #{tpu_custom_call.1} parent=0 // pred_check
    _
  $region11: #{tpu_custom_call.1} parent=0 // pred_check_branch
    %16 = sbr.rel (0) target = $region13
  $region12: #{tpu_custom_call.1} parent=0 // pred_region
    _
  $region13: #{tpu_custom_call.1} parent=0 // pred_fallthru
    _
  // Predicated region
  $region14: #{tpu_custom_call.1} parent=0 // pred_check
    _
  $region15: #{tpu_custom_call.1} parent=0 // pred_check_branch
    %18 = sbr.rel (0) target = $region17
  $region16: #{tpu_custom_call.1} parent=0 // pred_region
    _
  $region17: #{tpu_custom_call.1} parent=0 // pred_fallthru
    _
  // Predicated region
  $region18: #{tpu_custom_call.1} parent=0 // pred_check
    _
  $region19: #{tpu_custom_call.1} parent=0 // pred_check_branch
    %20 = sbr.rel (0) target = $region21
  $region20: #{tpu_custom_call.1} parent=0 // pred_region
    _
  $region21: #{tpu_custom_call.1} parent=0 // pred_fallthru
    _
  // Predicated region
  $region22: #{tpu_custom_call.1} parent=0 // pred_check
    _
  $region23: #{tpu_custom_call.1} parent=0 // pred_check_branch
    %22 = sbr.rel (0) target = $region25
  $region24: #{tpu_custom_call.1} parent=0 // pred_region
    _
  $region25: #{tpu_custom_call.1} parent=0 // pred_fallthru
    _
  %v23 = vld [vmem:[%s0] sm:$0xff]
  %v24 = vld [vmem:[%s0 + $0x8] sm:$0xff]
  %v25 = vld [vmem:[%s0 + $0x10] sm:$0xff]
  %v26 = vld [vmem:[%s0 + $0x18] sm:$0xff]
  %v27 = vld [vmem:[%s1] sm:$0xff]
  %v28 = vld [vmem:[%s1 + $0x8] sm:$0xff]
  %v29 = vld [vmem:[%s1 + $0x10] sm:$0xff]
  %v30 = vld [vmem:[%s1 + $0x18] sm:$0xff]
  %vm31 = vcmask 64512
  %v33 = vsel %vm31, %v27, 0
  %v36 = vsel %vm31, %v28, 0
  %38 = vmatprep.subr.mxu0 0.0
  %39 = vmatpush1.xpose.msra.mxu0 %v33
  %40 = vmatprep.subr.mxu0 0.0
  %41 = vmatpush1.xpose.msra.mxu0 %v36
  %42 = vmatprep.subr.mxu0 0.0
  %43 = vmatpush1.xpose.msra.mxu0 0.0
  %44 = vmatprep.subr.mxu0 0.0
  %45 = vmatpush1.xpose.msra.mxu0 0.0
  %46 = vmatprep.subr.mxu0 0.0
  %47 = vmatpush1.xpose.msra.mxu0 0.0
  %48 = vmatprep.subr.mxu0 0.0
  %49 = vmatpush1.xpose.msra.mxu0 0.0
  %50 = vmatprep.subr.mxu0 0.0
  %51 = vmatpush1.xpose.msra.mxu0 0.0
  %52 = vmatprep.subr.mxu0 0.0
  %53 = vmatpush1.xpose.msra.mxu0 0.0
  %54 = vmatprep.subr.mxu0 0.0
  %55 = vmatpush1.xpose.msra.mxu0 0.0
  %56 = vmatprep.subr.mxu0 0.0
  %57 = vmatpush1.xpose.msra.mxu0 0.0
  %58 = vmatprep.subr.mxu0 0.0
  %59 = vmatpush1.xpose.msra.mxu0 0.0
  %60 = vmatprep.subr.mxu0 0.0
  %61 = vmatpush1.xpose.msra.mxu0 0.0
  %62 = vmatprep.subr.mxu0 0.0
  %63 = vmatpush1.xpose.msra.mxu0 0.0
  %64 = vmatprep.subr.mxu0 0.0
  %65 = vmatpush1.xpose.msra.mxu0 0.0
  %66 = vmatprep.subr.mxu0 0.0
  %67 = vmatpush1.xpose.msra.mxu0 0.0
  %68 = vmatprep.subr.mxu0 0.0
  %69 = vmatpush1.xpose.msra.mxu0 0.0
  %70 = vmatprep.subr.mxu0 0.0
  %71 = vmatpush1.xpose.msra.mxu0 0.0
  %72 = vmatprep.subr.mxu0 0.0
  %73 = vmatpush1.xpose.msra.mxu0 0.0
  %74 = vmatprep.subr.mxu0 0.0
  %75 = vmatpush1.xpose.msra.mxu0 0.0
  %76 = vmatprep.subr.mxu0 0.0
  %77 = vmatpush1.xpose.msra.mxu0 0.0
  %78 = vmatprep.subr.mxu0 0.0
  %79 = vmatpush1.xpose.msra.mxu0 0.0
  %80 = vmatprep.subr.mxu0 0.0
  %81 = vmatpush1.xpose.msra.mxu0 0.0
  %82 = vmatprep.subr.mxu0 0.0
  %83 = vmatpush1.xpose.msra.mxu0 0.0
  %84 = vmatprep.subr.mxu0 0.0
  %85 = vmatpush1.xpose.msra.mxu0 0.0
  %86 = vmatprep.subr.mxu0 0.0
  %87 = vmatpush1.xpose.msra.mxu0 0.0
  %88 = vmatprep.subr.mxu0 0.0
  %89 = vmatpush1.xpose.msra.mxu0 0.0
  %90 = vmatprep.subr.mxu0 0.0
  %91 = vmatpush1.xpose.msra.mxu0 0.0
  %92 = vmatprep.subr.mxu0 0.0
  %93 = vmatpush1.xpose.msra.mxu0 0.0
  %94 = vmatprep.subr.mxu0 0.0
  %95 = vmatpush1.xpose.msra.mxu0 0.0
  %96 = vmatprep.subr.mxu0 0.0
  %97 = vmatpush1.xpose.msra.mxu0 0.0
  %98 = vmatprep.subr.mxu0 0.0
  %99 = vmatpush1.xpose.msra.mxu0 0.0
  %100 = vmatprep.subr.mxu0 0.0
  %101 = vmatpush1.xpose.msra.mxu0 0.0
  %102 = vmatprep.mubr.f32.mxu0 0.0
  %103 = vmatmul.mubr.f32.gmra.mrb[0].mxu0 %v33
  %v104 = vpop.f32.mrb[0].mxu0
  %v105 = vadd.f32 0.0, %v104
  %v106 = vpop.f32.mrb[0].mxu0
  %107 = vmatprep.mubr.f32.mxu0 0.0
  %108 = vmatmul.mubr.f32.gmra.mrb[0].mxu0 %v36
  %v109 = vpop.f32.mrb[0].mxu0
  %v110 = vadd.f32 0.0, %v109
  %v111 = vpop.f32.mrb[0].mxu0
  %112 = vdwg.mxu0
  %v114 = vsel %vm31, %v29, 0
  %v117 = vsel %vm31, %v30, 0
  %119 = vmatprep.subr.mxu0 0.0
  %120 = vmatpush1.xpose.msra.mxu0 %v114
  %121 = vmatprep.subr.mxu0 0.0
  %122 = vmatpush1.xpose.msra.mxu0 %v117
  %123 = vmatprep.subr.mxu0 0.0
  %124 = vmatpush1.xpose.msra.mxu0 0.0
  %125 = vmatprep.subr.mxu0 0.0
  %126 = vmatpush1.xpose.msra.mxu0 0.0
  %127 = vmatprep.subr.mxu0 0.0
  %128 = vmatpush1.xpose.msra.mxu0 0.0
  %129 = vmatprep.subr.mxu0 0.0
  %130 = vmatpush1.xpose.msra.mxu0 0.0
  %131 = vmatprep.subr.mxu0 0.0
  %132 = vmatpush1.xpose.msra.mxu0 0.0
  %133 = vmatprep.subr.mxu0 0.0
  %134 = vmatpush1.xpose.msra.mxu0 0.0
  %135 = vmatprep.subr.mxu0 0.0
  %136 = vmatpush1.xpose.msra.mxu0 0.0
  %137 = vmatprep.subr.mxu0 0.0
  %138 = vmatpush1.xpose.msra.mxu0 0.0
  %139 = vmatprep.subr.mxu0 0.0
  %140 = vmatpush1.xpose.msra.mxu0 0.0
  %141 = vmatprep.subr.mxu0 0.0
  %142 = vmatpush1.xpose.msra.mxu0 0.0
  %143 = vmatprep.subr.mxu0 0.0
  %144 = vmatpush1.xpose.msra.mxu0 0.0
  %145 = vmatprep.subr.mxu0 0.0
  %146 = vmatpush1.xpose.msra.mxu0 0.0
  %147 = vmatprep.subr.mxu0 0.0
  %148 = vmatpush1.xpose.msra.mxu0 0.0
  %149 = vmatprep.subr.mxu0 0.0
  %150 = vmatpush1.xpose.msra.mxu0 0.0
  %151 = vmatprep.subr.mxu0 0.0
  %152 = vmatpush1.xpose.msra.mxu0 0.0
  %153 = vmatprep.subr.mxu0 0.0
  %154 = vmatpush1.xpose.msra.mxu0 0.0
  %155 = vmatprep.subr.mxu0 0.0
  %156 = vmatpush1.xpose.msra.mxu0 0.0
  %157 = vmatprep.subr.mxu0 0.0
  %158 = vmatpush1.xpose.msra.mxu0 0.0
  %159 = vmatprep.subr.mxu0 0.0
  %160 = vmatpush1.xpose.msra.mxu0 0.0
  %161 = vmatprep.subr.mxu0 0.0
  %162 = vmatpush1.xpose.msra.mxu0 0.0
  %163 = vmatprep.subr.mxu0 0.0
  %164 = vmatpush1.xpose.msra.mxu0 0.0
  %165 = vmatprep.subr.mxu0 0.0
  %166 = vmatpush1.xpose.msra.mxu0 0.0
  %167 = vmatprep.subr.mxu0 0.0
  %168 = vmatpush1.xpose.msra.mxu0 0.0
  %169 = vmatprep.subr.mxu0 0.0
  %170 = vmatpush1.xpose.msra.mxu0 0.0
  %171 = vmatprep.subr.mxu0 0.0
  %172 = vmatpush1.xpose.msra.mxu0 0.0
  %173 = vmatprep.subr.mxu0 0.0
  %174 = vmatpush1.xpose.msra.mxu0 0.0
  %175 = vmatprep.subr.mxu0 0.0
  %176 = vmatpush1.xpose.msra.mxu0 0.0
  %177 = vmatprep.subr.mxu0 0.0
  %178 = vmatpush1.xpose.msra.mxu0 0.0
  %179 = vmatprep.subr.mxu0 0.0
  %180 = vmatpush1.xpose.msra.mxu0 0.0
  %181 = vmatprep.subr.mxu0 0.0
  %182 = vmatpush1.xpose.msra.mxu0 0.0
  %183 = vmatprep.mubr.f32.mxu0 0.0
  %184 = vmatmul.mubr.f32.gmra.mrb[0].mxu0 %v114
  %v185 = vpop.f32.mrb[0].mxu0
  %v186 = vadd.f32 0.0, %v185
  %v187 = vpop.f32.mrb[0].mxu0
  %188 = vmatprep.mubr.f32.mxu0 0.0
  %189 = vmatmul.mubr.f32.gmra.mrb[0].mxu0 %v117
  %v190 = vpop.f32.mrb[0].mxu0
  %v191 = vadd.f32 0.0, %v190
  %v192 = vpop.f32.mrb[0].mxu0
  %193 = vdwg.mxu0
  %v194 = vmax.f32 %v105, 0.0
  %v195 = vmax.f32 %v110, 0.0
  %v196 = vmax.f32 %v186, 0.0
  %v197 = vmax.f32 %v191, 0.0
  %vm198 = vcmask 130048
  %v199 = vsel %vm198, %v194, -inf
  %200 = vmax.xlane.f32.xlu0 %v199
  %v201 = vpop.xlane.xlu0 %200
  %v202 = vsel %vm198, %v195, -inf
  %203 = vmax.xlane.f32.xlu0 %v202
  %v204 = vpop.xlane.xlu0 %203
  %v205 = vsel %vm198, %v196, -inf
  %206 = vmax.xlane.f32.xlu0 %v205
  %v207 = vpop.xlane.xlu0 %206
  %v208 = vsel %vm198, %v197, -inf
  %209 = vmax.xlane.f32.xlu0 %v208
  %v210 = vpop.xlane.xlu0 %209
  %v211 = vsub.f32 %v194, %v201
  %v212 = vsub.f32 %v195, %v204
  %v213 = vsub.f32 %v196, %v207
  %v214 = vsub.f32 %v197, %v210
  %v215 = vmul.f32 %v211, 1.442695
  %v216 = vpow.pop %v215
  %v217 = vmul.f32 %v212, 1.442695
  %v218 = vpow.pop %v217
  %v219 = vmul.f32 %v213, 1.442695
  %v220 = vpow.pop %v219
  %v221 = vmul.f32 %v214, 1.442695
  %v222 = vpow.pop %v221
  %v223 = vsel %vm198, %v216, 0.0
  %224 = vadd.xlane.f32.xlu0 %v223
  %v225 = vpop.xlane.xlu0 %224
  %v226 = vsel %vm198, %v218, 0.0
  %227 = vadd.xlane.f32.xlu0 %v226
  %v228 = vpop.xlane.xlu0 %227
  %v229 = vsel %vm198, %v220, 0.0
  %230 = vadd.xlane.f32.xlu0 %v229
  %v231 = vpop.xlane.xlu0 %230
  %v232 = vsel %vm198, %v222, 0.0
  %233 = vadd.xlane.f32.xlu0 %v232
  %v234 = vpop.xlane.xlu0 %233
  %v235 = vrcp.pop %v225
  %v236 = vrcp.pop %v228
  %v237 = vrcp.pop %v231
  %v238 = vrcp.pop %v234
  %v239 = vmul.f32 %v225, %v235
  %v240 = vmul.f32 %v228, %v236
  %v241 = vmul.f32 %v231, %v237
  %v242 = vmul.f32 %v234, %v238
  %v243 = vsub.f32 2.0, %v239
  %v244 = vsub.f32 2.0, %v240
  %v245 = vsub.f32 2.0, %v241
  %v246 = vsub.f32 2.0, %v242
  %v247 = vmul.f32 %v235, %v243
  %v248 = vmul.f32 %v236, %v244
  %v249 = vmul.f32 %v237, %v245
  %v250 = vmul.f32 %v238, %v246
  %v251 = vmul.f32 %v216, %v247
  %v252 = vmul.f32 %v218, %v248
  %v253 = vmul.f32 %v220, %v249
  %v254 = vmul.f32 %v222, %v250
  %v256 = vsel %vm198, %v251, 0
  %v259 = vsel %vm198, %v252, 0
  %261 = vmatprep.subr.mxu0 0.0
  %262 = vmatpush1.msra.mxu0 %v23
  %263 = vmatprep.subr.mxu0 0.0
  %264 = vmatpush1.msra.mxu0 %v24
  %265 = vmatprep.subr.mxu0 0.0
  %266 = vmatpush1.msra.mxu0 0.0
  %267 = vmatprep.subr.mxu0 0.0
  %268 = vmatpush1.msra.mxu0 0.0
  %269 = vmatprep.subr.mxu0 0.0
  %270 = vmatpush1.msra.mxu0 0.0
  %271 = vmatprep.subr.mxu0 0.0
  %272 = vmatpush1.msra.mxu0 0.0
  %273 = vmatprep.subr.mxu0 0.0
  %274 = vmatpush1.msra.mxu0 0.0
  %275 = vmatprep.subr.mxu0 0.0
  %276 = vmatpush1.msra.mxu0 0.0
  %277 = vmatprep.subr.mxu0 0.0
  %278 = vmatpush1.msra.mxu0 0.0
  %279 = vmatprep.subr.mxu0 0.0
  %280 = vmatpush1.msra.mxu0 0.0
  %281 = vmatprep.subr.mxu0 0.0
  %282 = vmatpush1.msra.mxu0 0.0
  %283 = vmatprep.subr.mxu0 0.0
  %284 = vmatpush1.msra.mxu0 0.0
  %285 = vmatprep.subr.mxu0 0.0
  %286 = vmatpush1.msra.mxu0 0.0
  %287 = vmatprep.subr.mxu0 0.0
  %288 = vmatpush1.msra.mxu0 0.0
  %289 = vmatprep.subr.mxu0 0.0
  %290 = vmatpush1.msra.mxu0 0.0
  %291 = vmatprep.subr.mxu0 0.0
  %292 = vmatpush1.msra.mxu0 0.0
  %293 = vmatprep.subr.mxu0 0.0
  %294 = vmatpush1.msra.mxu0 0.0
  %295 = vmatprep.subr.mxu0 0.0
  %296 = vmatpush1.msra.mxu0 0.0
  %297 = vmatprep.subr.mxu0 0.0
  %298 = vmatpush1.msra.mxu0 0.0
  %299 = vmatprep.subr.mxu0 0.0
  %300 = vmatpush1.msra.mxu0 0.0
  %301 = vmatprep.subr.mxu0 0.0
  %302 = vmatpush1.msra.mxu0 0.0
  %303 = vmatprep.subr.mxu0 0.0
  %304 = vmatpush1.msra.mxu0 0.0
  %305 = vmatprep.subr.mxu0 0.0
  %306 = vmatpush1.msra.mxu0 0.0
  %307 = vmatprep.subr.mxu0 0.0
  %308 = vmatpush1.msra.mxu0 0.0
  %309 = vmatprep.subr.mxu0 0.0
  %310 = vmatpush1.msra.mxu0 0.0
  %311 = vmatprep.subr.mxu0 0.0
  %312 = vmatpush1.msra.mxu0 0.0
  %313 = vmatprep.subr.mxu0 0.0
  %314 = vmatpush1.msra.mxu0 0.0
  %315 = vmatprep.subr.mxu0 0.0
  %316 = vmatpush1.msra.mxu0 0.0
  %317 = vmatprep.subr.mxu0 0.0
  %318 = vmatpush1.msra.mxu0 0.0
  %319 = vmatprep.subr.mxu0 0.0
  %320 = vmatpush1.msra.mxu0 0.0
  %321 = vmatprep.subr.mxu0 0.0
  %322 = vmatpush1.msra.mxu0 0.0
  %323 = vmatprep.subr.mxu0 0.0
  %324 = vmatpush1.msra.mxu0 0.0
  %325 = vmatprep.mubr.f32.mxu0 0.0
  %326 = vmatmul.mubr.f32.gmra.mrb[0].mxu0 %v256
  %v327 = vpop.f32.mrb[0].mxu0
  %v328 = vadd.f32 0.0, %v327
  %v329 = vpop.f32.mrb[0].mxu0
  %330 = vmatprep.mubr.f32.mxu0 0.0
  %331 = vmatmul.mubr.f32.gmra.mrb[0].mxu0 %v259
  %v332 = vpop.f32.mrb[0].mxu0
  %v333 = vadd.f32 0.0, %v332
  %v334 = vpop.f32.mrb[0].mxu0
  %335 = vdwg.mxu0
  %v337 = vsel %vm198, %v253, 0
  %v340 = vsel %vm198, %v254, 0
  %342 = vmatprep.subr.mxu0 0.0
  %343 = vmatpush1.msra.mxu0 %v25
  %344 = vmatprep.subr.mxu0 0.0
  %345 = vmatpush1.msra.mxu0 %v26
  %346 = vmatprep.subr.mxu0 0.0
  %347 = vmatpush1.msra.mxu0 0.0
  %348 = vmatprep.subr.mxu0 0.0
  %349 = vmatpush1.msra.mxu0 0.0
  %350 = vmatprep.subr.mxu0 0.0
  %351 = vmatpush1.msra.mxu0 0.0
  %352 = vmatprep.subr.mxu0 0.0
  %353 = vmatpush1.msra.mxu0 0.0
  %354 = vmatprep.subr.mxu0 0.0
  %355 = vmatpush1.msra.mxu0 0.0
  %356 = vmatprep.subr.mxu0 0.0
  %357 = vmatpush1.msra.mxu0 0.0
  %358 = vmatprep.subr.mxu0 0.0
  %359 = vmatpush1.msra.mxu0 0.0
  %360 = vmatprep.subr.mxu0 0.0
  %361 = vmatpush1.msra.mxu0 0.0
  %362 = vmatprep.subr.mxu0 0.0
  %363 = vmatpush1.msra.mxu0 0.0
  %364 = vmatprep.subr.mxu0 0.0
  %365 = vmatpush1.msra.mxu0 0.0
  %366 = vmatprep.subr.mxu0 0.0
  %367 = vmatpush1.msra.mxu0 0.0
  %368 = vmatprep.subr.mxu0 0.0
  %369 = vmatpush1.msra.mxu0 0.0
  %370 = vmatprep.subr.mxu0 0.0
  %371 = vmatpush1.msra.mxu0 0.0
  %372 = vmatprep.subr.mxu0 0.0
  %373 = vmatpush1.msra.mxu0 0.0
  %374 = vmatprep.subr.mxu0 0.0
  %375 = vmatpush1.msra.mxu0 0.0
  %376 = vmatprep.subr.mxu0 0.0
  %377 = vmatpush1.msra.mxu0 0.0
  %378 = vmatprep.subr.mxu0 0.0
  %379 = vmatpush1.msra.mxu0 0.0
  %380 = vmatprep.subr.mxu0 0.0
  %381 = vmatpush1.msra.mxu0 0.0
  %382 = vmatprep.subr.mxu0 0.0
  %383 = vmatpush1.msra.mxu0 0.0
  %384 = vmatprep.subr.mxu0 0.0
  %385 = vmatpush1.msra.mxu0 0.0
  %386 = vmatprep.subr.mxu0 0.0
  %387 = vmatpush1.msra.mxu0 0.0
  %388 = vmatprep.subr.mxu0 0.0
  %389 = vmatpush1.msra.mxu0 0.0
  %390 = vmatprep.subr.mxu0 0.0
  %391 = vmatpush1.msra.mxu0 0.0
  %392 = vmatprep.subr.mxu0 0.0
  %393 = vmatpush1.msra.mxu0 0.0
  %394 = vmatprep.subr.mxu0 0.0
  %395 = vmatpush1.msra.mxu0 0.0
  %396 = vmatprep.subr.mxu0 0.0
  %397 = vmatpush1.msra.mxu0 0.0
  %398 = vmatprep.subr.mxu0 0.0
  %399 = vmatpush1.msra.mxu0 0.0
  %400 = vmatprep.subr.mxu0 0.0
  %401 = vmatpush1.msra.mxu0 0.0
  %402 = vmatprep.subr.mxu0 0.0
  %403 = vmatpush1.msra.mxu0 0.0
  %404 = vmatprep.subr.mxu0 0.0
  %405 = vmatpush1.msra.mxu0 0.0
  %406 = vmatprep.mubr.f32.mxu0 0.0
  %407 = vmatmul.mubr.f32.gmra.mrb[0].mxu0 %v337
  %v408 = vpop.f32.mrb[0].mxu0
  %v409 = vadd.f32 0.0, %v408
  %v410 = vpop.f32.mrb[0].mxu0
  %411 = vmatprep.mubr.f32.mxu0 0.0
  %412 = vmatmul.mubr.f32.gmra.mrb[0].mxu0 %v340
  %v413 = vpop.f32.mrb[0].mxu0
  %v414 = vadd.f32 0.0, %v413
  %v415 = vpop.f32.mrb[0].mxu0
  %416 = vdwg.mxu0
  %417 = vmatprep.subr.mxu0 0.0
  %418 = vmatpush1.msra.mxu0 %v328
  %419 = vmatprep.subr.mxu0 0.0
  %420 = vmatpush1.msra.mxu0 %v333
  %421 = vmatprep.subr.mxu0 0.0
  %422 = vmatpush1.msra.mxu0 0.0
  %423 = vmatprep.subr.mxu0 0.0
  %424 = vmatpush1.msra.mxu0 0.0
  %425 = vmatprep.subr.mxu0 0.0
  %426 = vmatpush1.msra.mxu0 0.0
  %427 = vmatprep.subr.mxu0 0.0
  %428 = vmatpush1.msra.mxu0 0.0
  %429 = vmatprep.subr.mxu0 0.0
  %430 = vmatpush1.msra.mxu0 0.0
  %431 = vmatprep.subr.mxu0 0.0
  %432 = vmatpush1.msra.mxu0 0.0
  %433 = vmatprep.subr.mxu0 0.0
  %434 = vmatpush1.msra.mxu0 0.0
  %435 = vmatprep.subr.mxu0 0.0
  %436 = vmatpush1.msra.mxu0 0.0
  %437 = vmatprep.subr.mxu0 0.0
  %438 = vmatpush1.msra.mxu0 0.0
  %439 = vmatprep.subr.mxu0 0.0
  %440 = vmatpush1.msra.mxu0 0.0
  %441 = vmatprep.subr.mxu0 0.0
  %442 = vmatpush1.msra.mxu0 0.0
  %443 = vmatprep.subr.mxu0 0.0
  %444 = vmatpush1.msra.mxu0 0.0
  %445 = vmatprep.subr.mxu0 0.0
  %446 = vmatpush1.msra.mxu0 0.0
  %447 = vmatprep.subr.mxu0 0.0
  %448 = vmatpush1.msra.mxu0 0.0
  %449 = vmatprep.subr.mxu0 0.0
  %450 = vmatpush1.msra.mxu0 0.0
  %451 = vmatprep.subr.mxu0 0.0
  %452 = vmatpush1.msra.mxu0 0.0
  %453 = vmatprep.subr.mxu0 0.0
  %454 = vmatpush1.msra.mxu0 0.0
  %455 = vmatprep.subr.mxu0 0.0
  %456 = vmatpush1.msra.mxu0 0.0
  %457 = vmatprep.subr.mxu0 0.0
  %458 = vmatpush1.msra.mxu0 0.0
  %459 = vmatprep.subr.mxu0 0.0
  %460 = vmatpush1.msra.mxu0 0.0
  %461 = vmatprep.subr.mxu0 0.0
  %462 = vmatpush1.msra.mxu0 0.0
  %463 = vmatprep.subr.mxu0 0.0
  %464 = vmatpush1.msra.mxu0 0.0
  %465 = vmatprep.subr.mxu0 0.0
  %466 = vmatpush1.msra.mxu0 0.0
  %467 = vmatprep.subr.mxu0 0.0
  %468 = vmatpush1.msra.mxu0 0.0
  %469 = vmatprep.subr.mxu0 0.0
  %470 = vmatpush1.msra.mxu0 0.0
  %471 = vmatprep.subr.mxu0 0.0
  %472 = vmatpush1.msra.mxu0 0.0
  %473 = vmatprep.subr.mxu0 0.0
  %474 = vmatpush1.msra.mxu0 0.0
  %475 = vmatprep.subr.mxu0 0.0
  %476 = vmatpush1.msra.mxu0 0.0
  %477 = vmatprep.subr.mxu0 0.0
  %478 = vmatpush1.msra.mxu0 0.0
  %479 = vmatprep.subr.mxu0 0.0
  %480 = vmatpush1.msra.mxu0 0.0
  %481 = vmatprep.mubr.f32.mxu0 0.0
  %482 = vmatmul.mubr.f32.gmra.mrb[0].mxu0 %v256
  %v483 = vpop.f32.mrb[0].mxu0
  %v484 = vadd.f32 0.0, %v483
  %v485 = vpop.f32.mrb[0].mxu0
  %486 = vmatprep.mubr.f32.mxu0 0.0
  %487 = vmatmul.mubr.f32.gmra.mrb[0].mxu0 %v259
  %v488 = vpop.f32.mrb[0].mxu0
  %v489 = vadd.f32 0.0, %v488
  %v490 = vpop.f32.mrb[0].mxu0
  %491 = vdwg.mxu0
  %492 = vmatprep.subr.mxu0 0.0
  %493 = vmatpush1.msra.mxu0 %v409
  %494 = vmatprep.subr.mxu0 0.0
  %495 = vmatpush1.msra.mxu0 %v414
  %496 = vmatprep.subr.mxu0 0.0
  %497 = vmatpush1.msra.mxu0 0.0
  %498 = vmatprep.subr.mxu0 0.0
  %499 = vmatpush1.msra.mxu0 0.0
  %500 = vmatprep.subr.mxu0 0.0
  %501 = vmatpush1.msra.mxu0 0.0
  %502 = vmatprep.subr.mxu0 0.0
  %503 = vmatpush1.msra.mxu0 0.0
  %504 = vmatprep.subr.mxu0 0.0
  %505 = vmatpush1.msra.mxu0 0.0
  %506 = vmatprep.subr.mxu0 0.0
  %507 = vmatpush1.msra.mxu0 0.0
  %508 = vmatprep.subr.mxu0 0.0
  %509 = vmatpush1.msra.mxu0 0.0
  %510 = vmatprep.subr.mxu0 0.0
  %511 = vmatpush1.msra.mxu0 0.0
  %512 = vmatprep.subr.mxu0 0.0
  %513 = vmatpush1.msra.mxu0 0.0
  %514 = vmatprep.subr.mxu0 0.0
  %515 = vmatpush1.msra.mxu0 0.0
  %516 = vmatprep.subr.mxu0 0.0
  %517 = vmatpush1.msra.mxu0 0.0
  %518 = vmatprep.subr.mxu0 0.0
  %519 = vmatpush1.msra.mxu0 0.0
  %520 = vmatprep.subr.mxu0 0.0
  %521 = vmatpush1.msra.mxu0 0.0
  %522 = vmatprep.subr.mxu0 0.0
  %523 = vmatpush1.msra.mxu0 0.0
  %524 = vmatprep.subr.mxu0 0.0
  %525 = vmatpush1.msra.mxu0 0.0
  %526 = vmatprep.subr.mxu0 0.0
  %527 = vmatpush1.msra.mxu0 0.0
  %528 = vmatprep.subr.mxu0 0.0
  %529 = vmatpush1.msra.mxu0 0.0
  %530 = vmatprep.subr.mxu0 0.0
  %531 = vmatpush1.msra.mxu0 0.0
  %532 = vmatprep.subr.mxu0 0.0
  %533 = vmatpush1.msra.mxu0 0.0
  %534 = vmatprep.subr.mxu0 0.0
  %535 = vmatpush1.msra.mxu0 0.0
  %536 = vmatprep.subr.mxu0 0.0
  %537 = vmatpush1.msra.mxu0 0.0
  %538 = vmatprep.subr.mxu0 0.0
  %539 = vmatpush1.msra.mxu0 0.0
  %540 = vmatprep.subr.mxu0 0.0
  %541 = vmatpush1.msra.mxu0 0.0
  %542 = vmatprep.subr.mxu0 0.0
  %543 = vmatpush1.msra.mxu0 0.0
  %544 = vmatprep.subr.mxu0 0.0
  %545 = vmatpush1.msra.mxu0 0.0
  %546 = vmatprep.subr.mxu0 0.0
  %547 = vmatpush1.msra.mxu0 0.0
  %548 = vmatprep.subr.mxu0 0.0
  %549 = vmatpush1.msra.mxu0 0.0
  %550 = vmatprep.subr.mxu0 0.0
  %551 = vmatpush1.msra.mxu0 0.0
  %552 = vmatprep.subr.mxu0 0.0
  %553 = vmatpush1.msra.mxu0 0.0
  %554 = vmatprep.subr.mxu0 0.0
  %555 = vmatpush1.msra.mxu0 0.0
  %556 = vmatprep.mubr.f32.mxu0 0.0
  %557 = vmatmul.mubr.f32.gmra.mrb[0].mxu0 %v337
  %v558 = vpop.f32.mrb[0].mxu0
  %v559 = vadd.f32 0.0, %v558
  %v560 = vpop.f32.mrb[0].mxu0
  %561 = vmatprep.mubr.f32.mxu0 0.0
  %562 = vmatmul.mubr.f32.gmra.mrb[0].mxu0 %v340
  %v563 = vpop.f32.mrb[0].mxu0
  %v564 = vadd.f32 0.0, %v563
  %v565 = vpop.f32.mrb[0].mxu0
  %566 = vdwg.mxu0
  %v567 = vmul.f32 %v484, 2.0
  %v568 = vmul.f32 %v489, 2.0
  %v569 = vmul.f32 %v559, 2.0
  %v570 = vmul.f32 %v564, 2.0
  %v571 = vsub.f32 %v567, %v23
  %v572 = vsub.f32 %v568, %v24
  %v573 = vsub.f32 %v569, %v25
  %v574 = vsub.f32 %v570, %v26
  %577 = vrot.lane.b32.xlu0 %v328, 4
  %v578 = vpop.permute.xlu0 %577
  %579 = vrot.lane.b32.xlu0 %v333, 4
  %v580 = vpop.permute.xlu0 %579
  %585 = vrot.lane.b32.xlu0 %v571, 8
  %v586 = vpop.permute.xlu0 %585
  %587 = vrot.lane.b32.xlu0 %v572, 8
  %v588 = vpop.permute.xlu0 %587
  %vm591 = vcmask 31744
  %v592 = vsel %vm591, %v23, %v578
  %v593 = vsel %vm591, %v24, %v580
  %v594 = vsel %vm31, %v592, %v586
  %v595 = vsel %vm31, %v593, %v588
  %vm596 = vcmask 97280
  %v597 = vsel %vm596, %v594, 1.0
  %v598 = vsel %vm596, %v595, 1.0
  %vm599 = vcmask 105472
  %600 = vst.msk [vmem:[#allocation2] sm:$0xff] %vm599, %v597
  %601 = vst.msk [vmem:[#allocation2 + $0x8] sm:$0xff] %vm599, %v598
  %604 = vrot.lane.b32.xlu0 %v409, 4
  %v605 = vpop.permute.xlu0 %604
  %606 = vrot.lane.b32.xlu0 %v414, 4
  %v607 = vpop.permute.xlu0 %606
  %612 = vrot.lane.b32.xlu0 %v573, 8
  %v613 = vpop.permute.xlu0 %612
  %614 = vrot.lane.b32.xlu0 %v574, 8
  %v615 = vpop.permute.xlu0 %614
  %v618 = vsel %vm591, %v25, %v605
  %v619 = vsel %vm591, %v26, %v607
  %v620 = vsel %vm31, %v618, %v613
  %v621 = vsel %vm31, %v619, %v615
  %v622 = vsel %vm596, %v620, 1.0
  %v623 = vsel %vm596, %v621, 1.0
  %624 = vst.msk [vmem:[#allocation2 + $0x10] sm:$0xff] %vm599, %v622
  %625 = vst.msk [vmem:[#allocation2 + $0x18] sm:$0xff] %vm599, %v623
  %v626 = vld [vmem:[#allocation2] sm:$0xff]
  %v627 = vld [vmem:[#allocation2 + $0x8] sm:$0xff]
  %v628 = vld [vmem:[#allocation2 + $0x10] sm:$0xff]
  %v629 = vld [vmem:[#allocation2 + $0x18] sm:$0xff]
  %v630 = vld [vmem:[%s2] sm:$0xff]
  %v631 = vld [vmem:[%s2 + $0x8] sm:$0xff]
  %v632 = vld [vmem:[%s2 + $0x10] sm:$0xff]
  %v633 = vld [vmem:[%s2 + $0x18] sm:$0xff]
  %v634 = vld [vmem:[%s3] sm:$0xff]
  %v636 = vsel %vm31, %v630, 0
  %v639 = vsel %vm31, %v631, 0
  %v642 = vsel %vm31, %v632, 0
  %v645 = vsel %vm31, %v633, 0
  %647 = vmatprep.subr.mxu0 0.0
  %648 = vmatpush1.msra.mxu0 %v634
  %649 = vmatprep.subr.mxu0 0.0
  %650 = vmatpush1.msra.mxu0 0.0
  %651 = vmatprep.subr.mxu0 0.0
  %652 = vmatpush1.msra.mxu0 0.0
  %653 = vmatprep.subr.mxu0 0.0
  %654 = vmatpush1.msra.mxu0 0.0
  %655 = vmatprep.subr.mxu0 0.0
  %656 = vmatpush1.msra.mxu0 0.0
  %657 = vmatprep.subr.mxu0 0.0
  %658 = vmatpush1.msra.mxu0 0.0
  %659 = vmatprep.subr.mxu0 0.0
  %660 = vmatpush1.msra.mxu0 0.0
  %661 = vmatprep.subr.mxu0 0.0
  %662 = vmatpush1.msra.mxu0 0.0
  %663 = vmatprep.subr.mxu0 0.0
  %664 = vmatpush1.msra.mxu0 0.0
  %665 = vmatprep.subr.mxu0 0.0
  %666 = vmatpush1.msra.mxu0 0.0
  %667 = vmatprep.subr.mxu0 0.0
  %668 = vmatpush1.msra.mxu0 0.0
  %669 = vmatprep.subr.mxu0 0.0
  %670 = vmatpush1.msra.mxu0 0.0
  %671 = vmatprep.subr.mxu0 0.0
  %672 = vmatpush1.msra.mxu0 0.0
  %673 = vmatprep.subr.mxu0 0.0
  %674 = vmatpush1.msra.mxu0 0.0
  %675 = vmatprep.subr.mxu0 0.0
  %676 = vmatpush1.msra.mxu0 0.0
  %677 = vmatprep.subr.mxu0 0.0
  %678 = vmatpush1.msra.mxu0 0.0
  %679 = vmatprep.subr.mxu0 0.0
  %680 = vmatpush1.msra.mxu0 0.0
  %681 = vmatprep.subr.mxu0 0.0
  %682 = vmatpush1.msra.mxu0 0.0
  %683 = vmatprep.subr.mxu0 0.0
  %684 = vmatpush1.msra.mxu0 0.0
  %685 = vmatprep.subr.mxu0 0.0
  %686 = vmatpush1.msra.mxu0 0.0
  %687 = vmatprep.subr.mxu0 0.0
  %688 = vmatpush1.msra.mxu0 0.0
  %689 = vmatprep.subr.mxu0 0.0
  %690 = vmatpush1.msra.mxu0 0.0
  %691 = vmatprep.subr.mxu0 0.0
  %692 = vmatpush1.msra.mxu0 0.0
  %693 = vmatprep.subr.mxu0 0.0
  %694 = vmatpush1.msra.mxu0 0.0
  %695 = vmatprep.subr.mxu0 0.0
  %696 = vmatpush1.msra.mxu0 0.0
  %697 = vmatprep.subr.mxu0 0.0
  %698 = vmatpush1.msra.mxu0 0.0
  %699 = vmatprep.subr.mxu0 0.0
  %700 = vmatpush1.msra.mxu0 0.0
  %701 = vmatprep.subr.mxu0 0.0
  %702 = vmatpush1.msra.mxu0 0.0
  %703 = vmatprep.subr.mxu0 0.0
  %704 = vmatpush1.msra.mxu0 0.0
  %705 = vmatprep.subr.mxu0 0.0
  %706 = vmatpush1.msra.mxu0 0.0
  %707 = vmatprep.subr.mxu0 0.0
  %708 = vmatpush1.msra.mxu0 0.0
  %709 = vmatprep.subr.mxu0 0.0
  %710 = vmatpush1.msra.mxu0 0.0
  %711 = vmatprep.mubr.f32.mxu0 0.0
  %712 = vmatmul.mubr.f32.gmra.mrb[0].mxu0 %v636
  %v713 = vpop.f32.mrb[0].mxu0
  %v714 = vadd.f32 0.0, %v713
  %v715 = vpop.f32.mrb[0].mxu0
  %716 = vmatprep.mubr.f32.mxu0 0.0
  %717 = vmatmul.mubr.f32.gmra.mrb[0].mxu0 %v639
  %v718 = vpop.f32.mrb[0].mxu0
  %v719 = vadd.f32 0.0, %v718
  %v720 = vpop.f32.mrb[0].mxu0
  %721 = vmatprep.mubr.f32.mxu0 0.0
  %722 = vmatmul.mubr.f32.gmra.mrb[0].mxu0 %v642
  %v723 = vpop.f32.mrb[0].mxu0
  %v724 = vadd.f32 0.0, %v723
  %v725 = vpop.f32.mrb[0].mxu0
  %726 = vmatprep.mubr.f32.mxu0 0.0
  %727 = vmatmul.mubr.f32.gmra.mrb[0].mxu0 %v645
  %v728 = vpop.f32.mrb[0].mxu0
  %v729 = vadd.f32 0.0, %v728
  %v730 = vpop.f32.mrb[0].mxu0
  %731 = vdwg.mxu0
  %v732 = vld [vmem:[%s4] sm:$0xff]
  %v733 = vld [vmem:[%s4 + $0x8] sm:$0x1f]
  %v735 = vsel %vm599, %v626, 0
  %v738 = vsel %vm599, %v627, 0
  %v741 = vsel %vm599, %v628, 0
  %v744 = vsel %vm599, %v629, 0
  %vm746 = vcmask 1044480
  %v748 = vsel %vm746, %v733, 0
  %750 = vmatprep.subr.mxu0 0.0
  %751 = vmatpush1.msra.mxu0 %v732
  %752 = vmatprep.subr.mxu0 0.0
  %753 = vmatpush1.msra.mxu0 %v748
  %754 = vmatprep.subr.mxu0 0.0
  %755 = vmatpush1.msra.mxu0 0.0
  %756 = vmatprep.subr.mxu0 0.0
  %757 = vmatpush1.msra.mxu0 0.0
  %758 = vmatprep.subr.mxu0 0.0
  %759 = vmatpush1.msra.mxu0 0.0
  %760 = vmatprep.subr.mxu0 0.0
  %761 = vmatpush1.msra.mxu0 0.0
  %762 = vmatprep.subr.mxu0 0.0
  %763 = vmatpush1.msra.mxu0 0.0
  %764 = vmatprep.subr.mxu0 0.0
  %765 = vmatpush1.msra.mxu0 0.0
  %766 = vmatprep.subr.mxu0 0.0
  %767 = vmatpush1.msra.mxu0 0.0
  %768 = vmatprep.subr.mxu0 0.0
  %769 = vmatpush1.msra.mxu0 0.0
  %770 = vmatprep.subr.mxu0 0.0
  %771 = vmatpush1.msra.mxu0 0.0
  %772 = vmatprep.subr.mxu0 0.0
  %773 = vmatpush1.msra.mxu0 0.0
  %774 = vmatprep.subr.mxu0 0.0
  %775 = vmatpush1.msra.mxu0 0.0
  %776 = vmatprep.subr.mxu0 0.0
  %777 = vmatpush1.msra.mxu0 0.0
  %778 = vmatprep.subr.mxu0 0.0
  %779 = vmatpush1.msra.mxu0 0.0
  %780 = vmatprep.subr.mxu0 0.0
  %781 = vmatpush1.msra.mxu0 0.0
  %782 = vmatprep.subr.mxu0 0.0
  %783 = vmatpush1.msra.mxu0 0.0
  %784 = vmatprep.subr.mxu0 0.0
  %785 = vmatpush1.msra.mxu0 0.0
  %786 = vmatprep.subr.mxu0 0.0
  %787 = vmatpush1.msra.mxu0 0.0
  %788 = vmatprep.subr.mxu0 0.0
  %789 = vmatpush1.msra.mxu0 0.0
  %790 = vmatprep.subr.mxu0 0.0
  %791 = vmatpush1.msra.mxu0 0.0
  %792 = vmatprep.subr.mxu0 0.0
  %793 = vmatpush1.msra.mxu0 0.0
  %794 = vmatprep.subr.mxu0 0.0
  %795 = vmatpush1.msra.mxu0 0.0
  %796 = vmatprep.subr.mxu0 0.0
  %797 = vmatpush1.msra.mxu0 0.0
  %798 = vmatprep.subr.mxu0 0.0
  %799 = vmatpush1.msra.mxu0 0.0
  %800 = vmatprep.subr.mxu0 0.0
  %801 = vmatpush1.msra.mxu0 0.0
  %802 = vmatprep.subr.mxu0 0.0
  %803 = vmatpush1.msra.mxu0 0.0
  %804 = vmatprep.subr.mxu0 0.0
  %805 = vmatpush1.msra.mxu0 0.0
  %806 = vmatprep.subr.mxu0 0.0
  %807 = vmatpush1.msra.mxu0 0.0
  %808 = vmatprep.subr.mxu0 0.0
  %809 = vmatpush1.msra.mxu0 0.0
  %810 = vmatprep.subr.mxu0 0.0
  %811 = vmatpush1.msra.mxu0 0.0
  %812 = vmatprep.subr.mxu0 0.0
  %813 = vmatpush1.msra.mxu0 0.0
  %814 = vmatprep.mubr.f32.mxu0 0.0
  %815 = vmatmul.mubr.f32.gmra.mrb[0].mxu0 %v735
  %v816 = vpop.f32.mrb[0].mxu0
  %v817 = vadd.f32 0.0, %v816
  %v818 = vpop.f32.mrb[0].mxu0
  %819 = vmatprep.mubr.f32.mxu0 0.0
  %820 = vmatmul.mubr.f32.gmra.mrb[0].mxu0 %v738
  %v821 = vpop.f32.mrb[0].mxu0
  %v822 = vadd.f32 0.0, %v821
  %v823 = vpop.f32.mrb[0].mxu0
  %824 = vmatprep.mubr.f32.mxu0 0.0
  %825 = vmatmul.mubr.f32.gmra.mrb[0].mxu0 %v741
  %v826 = vpop.f32.mrb[0].mxu0
  %v827 = vadd.f32 0.0, %v826
  %v828 = vpop.f32.mrb[0].mxu0
  %829 = vmatprep.mubr.f32.mxu0 0.0
  %830 = vmatmul.mubr.f32.gmra.mrb[0].mxu0 %v744
  %v831 = vpop.f32.mrb[0].mxu0
  %v832 = vadd.f32 0.0, %v831
  %v833 = vpop.f32.mrb[0].mxu0
  %834 = vdwg.mxu0
  %v835 = vmul.f32 %v817, %v714
  %v836 = vmul.f32 %v822, %v719
  %v837 = vmul.f32 %v827, %v724
  %v838 = vmul.f32 %v832, %v729
  %v839 = vld [vmem:[%s5] sm:$0xff]
  %v840 = vld [vmem:[%s5 + $0x8] sm:$0xff]
  %v841 = vld [vmem:[%s5 + $0x10] sm:$0xff]
  %v842 = vld [vmem:[%s5 + $0x18] sm:$0xff]
  %v843 = vld [vmem:[%s5 + $0x20] sm:$0xff]
  %v844 = vld [vmem:[%s5 + $0x28] sm:$0xff]
  %v845 = vld [vmem:[%s5 + $0x30] sm:$0xff]
  %v846 = vld [vmem:[%s5 + $0x38] sm:$0xff]
  %v847 = vld [vmem:[%s5 + $0x40] sm:$0xff]
  %v848 = vld [vmem:[%s5 + $0x48] sm:$0xff]
  %v849 = vld [vmem:[%s5 + $0x50] sm:$0xff]
  %v850 = vld [vmem:[%s5 + $0x58] sm:$0xff]
  %v851 = vld [vmem:[%s5 + $0x60] sm:$0xff]
  %vm852 = vcmask 850944
  %v854 = vsel %vm852, %v835, 0
  %v857 = vsel %vm852, %v836, 0
  %v860 = vsel %vm852, %v837, 0
  %v863 = vsel %vm852, %v838, 0
  %865 = vmatprep.subr.mxu0 0.0
  %866 = vmatpush1.msra.mxu0 %v839
  %867 = vmatprep.subr.mxu0 0.0
  %868 = vmatpush1.msra.mxu0 %v840
  %869 = vmatprep.subr.mxu0 0.0
  %870 = vmatpush1.msra.mxu0 %v841
  %871 = vmatprep.subr.mxu0 0.0
  %872 = vmatpush1.msra.mxu0 %v842
  %873 = vmatprep.subr.mxu0 0.0
  %874 = vmatpush1.msra.mxu0 %v843
  %875 = vmatprep.subr.mxu0 0.0
  %876 = vmatpush1.msra.mxu0 %v844
  %877 = vmatprep.subr.mxu0 0.0
  %878 = vmatpush1.msra.mxu0 %v845
  %879 = vmatprep.subr.mxu0 0.0
  %880 = vmatpush1.msra.mxu0 %v846
  %881 = vmatprep.subr.mxu0 0.0
  %882 = vmatpush1.msra.mxu0 %v847
  %883 = vmatprep.subr.mxu0 0.0
  %884 = vmatpush1.msra.mxu0 %v848
  %885 = vmatprep.subr.mxu0 0.0
  %886 = vmatpush1.msra.mxu0 %v849
  %887 = vmatprep.subr.mxu0 0.0
  %888 = vmatpush1.msra.mxu0 %v850
  %889 = vmatprep.subr.mxu0 0.0
  %890 = vmatpush1.msra.mxu0 %v851
  %891 = vmatprep.subr.mxu0 0.0
  %892 = vmatpush1.msra.mxu0 0.0
  %893 = vmatprep.subr.mxu0 0.0
  %894 = vmatpush1.msra.mxu0 0.0
  %895 = vmatprep.subr.mxu0 0.0
  %896 = vmatpush1.msra.mxu0 0.0
  %897 = vmatprep.subr.mxu0 0.0
  %898 = vmatpush1.msra.mxu0 0.0
  %899 = vmatprep.subr.mxu0 0.0
  %900 = vmatpush1.msra.mxu0 0.0
  %901 = vmatprep.subr.mxu0 0.0
  %902 = vmatpush1.msra.mxu0 0.0
  %903 = vmatprep.subr.mxu0 0.0
  %904 = vmatpush1.msra.mxu0 0.0
  %905 = vmatprep.subr.mxu0 0.0
  %906 = vmatpush1.msra.mxu0 0.0
  %907 = vmatprep.subr.mxu0 0.0
  %908 = vmatpush1.msra.mxu0 0.0
  %909 = vmatprep.subr.mxu0 0.0
  %910 = vmatpush1.msra.mxu0 0.0
  %911 = vmatprep.subr.mxu0 0.0
  %912 = vmatpush1.msra.mxu0 0.0
  %913 = vmatprep.subr.mxu0 0.0
  %914 = vmatpush1.msra.mxu0 0.0
  %915 = vmatprep.subr.mxu0 0.0
  %916 = vmatpush1.msra.mxu0 0.0
  %917 = vmatprep.subr.mxu0 0.0
  %918 = vmatpush1.msra.mxu0 0.0
  %919 = vmatprep.subr.mxu0 0.0
  %920 = vmatpush1.msra.mxu0 0.0
  %921 = vmatprep.subr.mxu0 0.0
  %922 = vmatpush1.msra.mxu0 0.0
  %923 = vmatprep.subr.mxu0 0.0
  %924 = vmatpush1.msra.mxu0 0.0
  %925 = vmatprep.subr.mxu0 0.0
  %926 = vmatpush1.msra.mxu0 0.0
  %927 = vmatprep.subr.mxu0 0.0
  %928 = vmatpush1.msra.mxu0 0.0
  %929 = vmatprep.mubr.f32.mxu0 0.0
  %930 = vmatmul.mubr.f32.gmra.mrb[0].mxu0 %v854
  %v931 = vpop.f32.mrb[0].mxu0
  %v932 = vadd.f32 0.0, %v931
  %v933 = vpop.f32.mrb[0].mxu0
  %934 = vmatprep.mubr.f32.mxu0 0.0
  %935 = vmatmul.mubr.f32.gmra.mrb[0].mxu0 %v857
  %v936 = vpop.f32.mrb[0].mxu0
  %v937 = vadd.f32 0.0, %v936
  %v938 = vpop.f32.mrb[0].mxu0
  %939 = vmatprep.mubr.f32.mxu0 0.0
  %940 = vmatmul.mubr.f32.gmra.mrb[0].mxu0 %v860
  %v941 = vpop.f32.mrb[0].mxu0
  %v942 = vadd.f32 0.0, %v941
  %v943 = vpop.f32.mrb[0].mxu0
  %944 = vmatprep.mubr.f32.mxu0 0.0
  %945 = vmatmul.mubr.f32.gmra.mrb[0].mxu0 %v863
  %v946 = vpop.f32.mrb[0].mxu0
  %v947 = vadd.f32 0.0, %v946
  %v948 = vpop.f32.mrb[0].mxu0
  %949 = vdwg.mxu0
  %950 = vst.msk [vmem:[%s6] sm:$0xff] %vm31, %v932
  %951 = vst.msk [vmem:[%s6 + $0x8] sm:$0xff] %vm31, %v937
  %952 = vst.msk [vmem:[%s6 + $0x10] sm:$0xff] %vm31, %v942
  %953 = vst.msk [vmem:[%s6 + $0x18] sm:$0xff] %vm31, %v947
  // Predicated region
  $region26: #{tpu_custom_call.1} parent=0 // pred_check
    _
  $region27: #{tpu_custom_call.1} parent=0 // pred_check_branch
    %955 = sbr.rel (0) target = $region29
  $region28: #{tpu_custom_call.1} parent=0 // pred_region
    _
  $region29: #{tpu_custom_call.1} parent=0 // pred_fallthru
    _
  // Predicated region
  $region30: #{tpu_custom_call.1} parent=0 // pred_check
    _
  $region31: #{tpu_custom_call.1} parent=0 // pred_check_branch
    %957 = sbr.rel (0) target = $region33
  $region32: #{tpu_custom_call.1} parent=0 // pred_region
    _
  $region33: #{tpu_custom_call.1} parent=0 // pred_fallthru
    _

</llo_original>
